<compile_context>
chip_gen: v7x
topology: tpu7x:2x2x1
jax: 0.10.0
libtpu: 0.0.40
codegen_flags: <defaults>
</compile_context>

<pallas_src>
import functools

import jax
import jax.numpy as jnp
from jax import lax
from jax.experimental import pallas as pl
from jax.experimental.pallas import tpu as pltpu


# With key tiling every block is O(tile) sized; 32 MiB is ample headroom on
# v5e/v6e (128 MiB physical) and comfortably inside v7x's 64 MiB physical.
_VMEM_LIMIT_BYTES = 32 * 1024 * 1024


def _proj_kernel(x_ref, wk_ref, bk_ref, wvo_ref, bvo_ref, k_ref, vo_ref):
    """One row tile of  K = X @ Wk^T + bk  and  VO = [X @ Wv^T + bv | 1].

    bf16 MXU operands, f32 accumulation, bf16 outputs (halves the KV stream
    that the score kernel re-reads per query tile).
    """
    x = x_ref[...].astype(jnp.bfloat16)                               # (TM, C)
    k = jnp.dot(x, wk_ref[...], preferred_element_type=jnp.float32) + bk_ref[...]
    vo = jnp.dot(x, wvo_ref[...], preferred_element_type=jnp.float32) + bvo_ref[...]
    k_ref[...] = k.astype(k_ref.dtype)
    vo_ref[...] = vo.astype(vo_ref.dtype)


def _attn_score_kernel(xq_ref, k_ref, vo_ref, y_ref, m_scr, nd_scr, *,
                       n_keys, tk):
    """Online-softmax attention scores for one (query tile, key tile) step.

    xq_ref: (TR, C)  query rows (f32 in HBM, cast to bf16 here)
    k_ref : (TK, C)  key rows for this key tile (bf16)
    vo_ref: (TK, 2)  [V | 1] for this key tile (bf16)
    y_ref : (1, TR)  lane-dense scores, written on the last key step
    m_scr : (1, TR)  running max            (f32 scratch)
    nd_scr: (2, TR)  running [num | den]    (f32 scratch)
    """
    kj = pl.program_id(1)

    @pl.when(kj == 0)
    def _():
        m_scr[...] = jnp.full(m_scr.shape, -jnp.inf, dtype=m_scr.dtype)
        nd_scr[...] = jnp.zeros(nd_scr.shape, dtype=nd_scr.dtype)

    xq = xq_ref[...].astype(jnp.bfloat16)                             # (TR, C)
    kt = k_ref[...]                                                   # (TK, C)
    vo = vo_ref[...]                                                  # (TK, 2)

    # E^T tile: et[i, j] = K_i . Xq_j, contraction on the last dims.  Mosaic
    # transposes the small xq operand for the MXU (XLU slot, hidden under the
    # matmul); the large K tile is consumed as-is.
    et = lax.dot_general(kt, xq, (((1,), (1,)), ((), ())),
                         preferred_element_type=jnp.float32)          # (TK, TR)

    if n_keys % tk != 0:
        # Last key tile is partial: rows past N hold stale VMEM from the edge
        # DMA. Mask them out of the softmax and zero their [V|1] entries.
        row = kj * tk + lax.broadcasted_iota(jnp.int32, (tk, 1), 0)
        valid = row < n_keys
        et = jnp.where(valid, et, -jnp.inf)
        vo = jnp.where(valid, vo, jnp.zeros_like(vo))

    # Online (max-stabilized) softmax over the key axis (axis 0 here).
    m_prev = m_scr[...]                                               # (1, TR)
    m_new = jnp.maximum(m_prev, jnp.max(et, axis=0, keepdims=True))
    alpha = jnp.exp(m_prev - m_new)                                   # (1, TR)
    p = jnp.exp(et - m_new)                                           # (TK, TR)

    # One matmul against [V | 1] yields the softmax numerator and denominator
    # together; normalization is deferred to a single O(TR) reciprocal.
    nd = lax.dot_general(vo, p.astype(jnp.bfloat16),
                         (((0,), (0,)), ((), ())),
                         preferred_element_type=jnp.float32)          # (2, TR)

    nd_scr[...] = alpha * nd_scr[...] + nd
    m_scr[...] = m_new

    @pl.when(kj == pl.num_programs(1) - 1)
    def _():
        acc = nd_scr[...]
        # approx reciprocal rides the otherwise-idle EUP slot; ~2^-12 relative
        # error, far inside the bf16-operand tolerance.
        y_ref[...] = acc[0:1, :] * pl.reciprocal(acc[1:2, :], approx=True)


def attn_scores(X, Wk, bk, Wv, bv, *, row_tile=256, key_tile=512, proj_tile=512):
    """Per-node attention scores y (shape (N,)) via the Pallas kernels."""
    N, C = X.shape
    f32, bf16 = jnp.float32, jnp.bfloat16
    X = X.astype(f32)

    # Small weight repacks (no padded copies of X itself):
    Wkt = Wk.T.astype(bf16)                                           # (C, C)
    bk2 = bk.reshape(1, C).astype(f32)                                # (1, C)
    Wvo = jnp.concatenate([Wv.T.astype(bf16), jnp.zeros((C, 1), bf16)], axis=1)  # (C, 2)
    bvo = jnp.concatenate([bv.reshape(1).astype(f32),
                           jnp.ones((1,), f32)]).reshape(1, 2)        # (1, 2) = [bv, 1]

    # --- kernel 1: row-tiled K / [V|1] projection ---------------------------
    tm = N if N <= proj_tile else proj_tile
    K, VO = pl.pallas_call(
        _proj_kernel,
        out_shape=(jax.ShapeDtypeStruct((N, C), bf16),
                   jax.ShapeDtypeStruct((N, 2), bf16)),
        grid=(pl.cdiv(N, tm),),
        in_specs=[pl.BlockSpec((tm, C), lambda i: (i, 0)),    # X row tile
                  pl.BlockSpec((C, C), lambda i: (0, 0)),     # Wk^T (resident)
                  pl.BlockSpec((1, C), lambda i: (0, 0)),     # bk
                  pl.BlockSpec((C, 2), lambda i: (0, 0)),     # [Wv^T | 0]
                  pl.BlockSpec((1, 2), lambda i: (0, 0))],    # [bv | 1]
        out_specs=[pl.BlockSpec((tm, C), lambda i: (i, 0)),
                   pl.BlockSpec((tm, 2), lambda i: (i, 0))],
        compiler_params=pltpu.CompilerParams(
            dimension_semantics=("parallel",),
            vmem_limit_bytes=_VMEM_LIMIT_BYTES),
    )(X, Wkt, bk2, Wvo, bvo)

    # --- kernel 2: flash-style scores, grid = (query tiles, key tiles) ------
    tr = N if N <= row_tile else row_tile
    tk = N if N <= key_tile else key_tile
    nq, nk = pl.cdiv(N, tr), pl.cdiv(N, tk)

    y = pl.pallas_call(
        functools.partial(_attn_score_kernel, n_keys=N, tk=tk),
        out_shape=jax.ShapeDtypeStruct((1, N), f32),
        grid=(nq, nk),
        in_specs=[pl.BlockSpec((tr, C), lambda qi, kj: (qi, 0)),   # query tile
                  pl.BlockSpec((tk, C), lambda qi, kj: (kj, 0)),   # key tile
                  pl.BlockSpec((tk, 2), lambda qi, kj: (kj, 0))],  # [V|1] tile
        out_specs=pl.BlockSpec((1, tr), lambda qi, kj: (0, qi)),
        scratch_shapes=[pltpu.VMEM((1, tr), jnp.float32),          # running max
                        pltpu.VMEM((2, tr), jnp.float32)],         # [num | den]
        compiler_params=pltpu.CompilerParams(
            dimension_semantics=("parallel", "arbitrary"),         # megacore on q
            vmem_limit_bytes=_VMEM_LIMIT_BYTES),
    )(X, K, VO)

    return y[0]


def attn_pool_forward(A, X, Wk, bk, Wv, bv, k):
    """Full attnPool.forward: returns (A_pooled, X_pooled, indices)."""
    y = attn_scores(X, Wk, bk, Wv, bv)                               # (N,)
    # TODO(synk): top-k / unique / data-dependent gathers have no clean Pallas
    # tiling and are left to XLA; the kernels cover the dense score path.
    _, idx = lax.top_k(y, k)                 # torch.topk(largest=True)
    idx = jnp.sort(idx)                      # .unique(): topk ids are distinct -> sort
    X_pooled = X[idx]                                                # (k, C)
    A_pooled = A[idx[:, None], idx[None, :]]                         # (k, k)
    return A_pooled, X_pooled, idx


def _reference(A, X, Wk, bk, Wv, bv, k):
    """Plain-JAX reference of the PyTorch forward for verification."""
    K = X @ Wk.T + bk
    V = (X @ Wv.T + bv)[:, 0]
    E = X @ K.T
    P_ = jax.nn.softmax(E, axis=1)
    y = P_ @ V
    _, idx = lax.top_k(y, k)
    idx = jnp.sort(idx)
    return A[idx][:, idx], X[idx], idx, y


def _make_inputs(key, N, C):
    kx, ka, kwk, kbk, kwv, kbv = jax.random.split(key, 6)
    X = jax.random.normal(kx, (N, C), dtype=jnp.float32)
    A = (jax.random.uniform(ka, (N, N)) > 0.5).astype(jnp.float32)
    A = jnp.maximum(A, A.T)  # symmetric adjacency
    bound = 1.0 / jnp.sqrt(jnp.float32(C))   # nn.Linear-style init bound
    Wk = jax.random.uniform(kwk, (C, C), minval=-bound, maxval=bound, dtype=jnp.float32)
    bk = jax.random.uniform(kbk, (C,), minval=-bound, maxval=bound, dtype=jnp.float32)
    Wv = jax.random.uniform(kwv, (1, C), minval=-bound, maxval=bound, dtype=jnp.float32)
    bv = jax.random.uniform(kbv, (1,), minval=-bound, maxval=bound, dtype=jnp.float32)
    return A, X, Wk, bk, Wv, bv


def _check_case(key, N, C, k, tol=5e-2):
    A, X, Wk, bk, Wv, bv = _make_inputs(key, N, C)

    A_pooled, X_pooled, idx = attn_pool_forward(A, X, Wk, bk, Wv, bv, k)
    jax.block_until_ready((A_pooled, X_pooled, idx))

    assert A_pooled.shape == (k, k) and X_pooled.shape == (k, C) and idx.shape == (k,)

    y = attn_scores(X, Wk, bk, Wv, bv)
    _, _, idx_ref, y_ref = _reference(A, X, Wk, bk, Wv, bv, k)

    # Dense scores: tolerance sized for bf16 MXU operands with f32 accumulation.
    assert jnp.allclose(y, y_ref, rtol=tol, atol=tol), "score mismatch"

    # Pooled outputs must be exact gathers at the returned indices; the index
    # vector must be a sorted set of distinct valid node ids (.unique()).
    assert jnp.array_equal(X_pooled, X[idx])
    assert jnp.array_equal(A_pooled, A[idx[:, None], idx[None, :]])
    assert bool(jnp.all(idx[1:] > idx[:-1]))
    assert int(idx.min()) >= 0 and int(idx.max()) < N

    # Selection consistency: every chosen node's reference score must be within
    # tol of the reference k-th-largest score.
    y_sorted = jnp.sort(y_ref)
    kth = float(y_sorted[N - k])
    assert float(jnp.min(y_ref[idx])) >= kth - tol, "selection mismatch"

    # When the k-th / (k+1)-th reference gap dwarfs the numeric error the
    # selected set must match the f32 reference exactly.
    if N > k:
        gap = kth - float(y_sorted[N - k - 1])
        if gap > 4 * tol:
            assert jnp.array_equal(idx, idx_ref)


if __name__ == "__main__":
    root = jax.random.PRNGKey(0)
    key_a, key_b, key_c = jax.random.split(root, 3)
    # Toy graph: full-extent single tiles on both kernels.
    _check_case(key_a, N=16, C=8, k=4)
    # Medium graph: 2 query tiles x 1 key tile; 'parallel' query axis (megacore).
    _check_case(key_b, N=512, C=32, k=64)
    # Non-divisible shapes: partial row / query / key tiles exercise edge masking.
    _check_case(key_c, N=700, C=48, k=96)
    print("KERNEL_OK")
</pallas_src>

<mosaic_0001>
module attributes {stable_mosaic.version = 11 : i64} {
  func.func @_proj_kernel(%arg0: i32, %arg1: memref<16x8xf32, #tpu.memory_space<vmem>>, %arg2: memref<8x8xbf16, #tpu.memory_space<vmem>>, %arg3: memref<1x8xf32, #tpu.memory_space<vmem>>, %arg4: memref<8x2xbf16, #tpu.memory_space<vmem>>, %arg5: memref<1x2xf32, #tpu.memory_space<vmem>>, %arg6: memref<16x8xbf16, #tpu.memory_space<vmem>>, %arg7: memref<16x2xbf16, #tpu.memory_space<vmem>>) attributes {dimension_semantics = [#tpu.dimension_semantics<parallel>], iteration_bounds = array<i64: 1>, scalar_prefetch = 0 : i64, scratch_operands = 0 : i64, tpu.core_type = #tpu.core_type<tc>, window_params = [{transform_indices = @transform_0, window_bounds = array<i64: 16, 8>}, {pipeline_mode = #tpu.pipeline_mode<synchronous>, transform_indices = @transform_1, window_bounds = array<i64: 8, 8>}, {pipeline_mode = #tpu.pipeline_mode<synchronous>, transform_indices = @transform_2, window_bounds = array<i64: 1, 8>}, {pipeline_mode = #tpu.pipeline_mode<synchronous>, transform_indices = @transform_3, window_bounds = array<i64: 8, 2>}, {pipeline_mode = #tpu.pipeline_mode<synchronous>, transform_indices = @transform_4, window_bounds = array<i64: 1, 2>}, {transform_indices = @transform_5, window_bounds = array<i64: 16, 8>}, {transform_indices = @transform_6, window_bounds = array<i64: 16, 2>}]} {
    %c0 = arith.constant 0 : index
    %c0_0 = arith.constant 0 : index
    %0 = vector.load %arg1[%c0, %c0_0] : memref<16x8xf32, #tpu.memory_space<vmem>>, vector<16x8xf32>
    %1 = arith.truncf %0 : vector<16x8xf32> to vector<16x8xbf16>
    %c0_1 = arith.constant 0 : index
    %c0_2 = arith.constant 0 : index
    %2 = vector.load %arg2[%c0_1, %c0_2] : memref<8x8xbf16, #tpu.memory_space<vmem>>, vector<8x8xbf16>
    %cst = arith.constant dense<0.000000e+00> : vector<16x8xf32>
    %3 = tpu.matmul %1, %2, %cst {dimension_numbers = #tpu.dot_dimension_numbers<[1], [0], [0], [1], [0, 0, 1, 1], [], []>} : vector<16x8xbf16>, vector<8x8xbf16>, vector<16x8xf32> -> vector<16x8xf32>
    %c0_3 = arith.constant 0 : index
    %c0_4 = arith.constant 0 : index
    %4 = vector.load %arg3[%c0_3, %c0_4] : memref<1x8xf32, #tpu.memory_space<vmem>>, vector<1x8xf32>
    %5 = vector.broadcast %4 : vector<1x8xf32> to vector<16x8xf32>
    %6 = arith.addf %3, %5 : vector<16x8xf32>
    %c0_5 = arith.constant 0 : index
    %c0_6 = arith.constant 0 : index
    %7 = vector.load %arg4[%c0_5, %c0_6] : memref<8x2xbf16, #tpu.memory_space<vmem>>, vector<8x2xbf16>
    %cst_7 = arith.constant dense<0.000000e+00> : vector<16x2xf32>
    %8 = tpu.matmul %1, %7, %cst_7 {dimension_numbers = #tpu.dot_dimension_numbers<[1], [0], [0], [1], [0, 0, 1, 1], [], []>} : vector<16x8xbf16>, vector<8x2xbf16>, vector<16x2xf32> -> vector<16x2xf32>
    %c0_8 = arith.constant 0 : index
    %c0_9 = arith.constant 0 : index
    %9 = vector.load %arg5[%c0_8, %c0_9] : memref<1x2xf32, #tpu.memory_space<vmem>>, vector<1x2xf32>
    %10 = vector.broadcast %9 : vector<1x2xf32> to vector<16x2xf32>
    %11 = arith.addf %8, %10 : vector<16x2xf32>
    %12 = arith.truncf %6 : vector<16x8xf32> to vector<16x8xbf16>
    %c0_10 = arith.constant 0 : index
    %c0_11 = arith.constant 0 : index
    %13 = vector.load %arg6[%c0_10, %c0_11] : memref<16x8xbf16, #tpu.memory_space<vmem>>, vector<16x8xbf16>
    tpu.vector_store %arg6[%c0_10, %c0_11], %12 {strides = array<i32>} : memref<16x8xbf16, #tpu.memory_space<vmem>>, vector<16x8xbf16>,
    %14 = arith.truncf %11 : vector<16x2xf32> to vector<16x2xbf16>
    %c0_12 = arith.constant 0 : index
    %c0_13 = arith.constant 0 : index
    %15 = vector.load %arg7[%c0_12, %c0_13] : memref<16x2xbf16, #tpu.memory_space<vmem>>, vector<16x2xbf16>
    tpu.vector_store %arg7[%c0_12, %c0_13], %14 {strides = array<i32>} : memref<16x2xbf16, #tpu.memory_space<vmem>>, vector<16x2xbf16>,
    return
  }
  func.func @transform_0(%arg0: i32) -> (i32, i32) {
    %c0_i32 = arith.constant 0 : i32
    %c0_i32_0 = arith.constant 0 : i32
    return %arg0, %c0_i32 : i32, i32
  }
  func.func @transform_1(%arg0: i32) -> (i32, i32) {
    %c0_i32 = arith.constant 0 : i32
    %c0_i32_0 = arith.constant 0 : i32
    %c0_i32_1 = arith.constant 0 : i32
    return %c0_i32, %c0_i32_0 : i32, i32
  }
  func.func @transform_2(%arg0: i32) -> (i32, i32) {
    %c0_i32 = arith.constant 0 : i32
    %c0_i32_0 = arith.constant 0 : i32
    %c0_i32_1 = arith.constant 0 : i32
    return %c0_i32, %c0_i32_0 : i32, i32
  }
  func.func @transform_3(%arg0: i32) -> (i32, i32) {
    %c0_i32 = arith.constant 0 : i32
    %c0_i32_0 = arith.constant 0 : i32
    %c0_i32_1 = arith.constant 0 : i32
    return %c0_i32, %c0_i32_0 : i32, i32
  }
  func.func @transform_4(%arg0: i32) -> (i32, i32) {
    %c0_i32 = arith.constant 0 : i32
    %c0_i32_0 = arith.constant 0 : i32
    %c0_i32_1 = arith.constant 0 : i32
    return %c0_i32, %c0_i32_0 : i32, i32
  }
  func.func @transform_5(%arg0: i32) -> (i32, i32) {
    %c0_i32 = arith.constant 0 : i32
    %c0_i32_0 = arith.constant 0 : i32
    return %arg0, %c0_i32 : i32, i32
  }
  func.func @transform_6(%arg0: i32) -> (i32, i32) {
    %c0_i32 = arith.constant 0 : i32
    %c0_i32_0 = arith.constant 0 : i32
    return %arg0, %c0_i32 : i32, i32
  }
}

</mosaic_0001>

<llo_original>
// kernel: tpu_custom_call.1
$region0: #{tpu_custom_call.1}
  #allocation0 [shape = 'u32[]', space=smem, size = 0x4, offset = 0x4, fixed_abs, tag = 'smem constant byte address 0x4 - core index']
  #allocation1 [shape = 'u32[144,128]{1,0:T(1,128)}', space=vmem, size = 0x12000, scoped, tag = 'internal scratch']
  %s0 = inlined_call_operand.vmem [shape: f32[16,8], index: 0, kind: input, shape index: {}]
  %s1 = inlined_call_operand.vmem [shape: bf16[8,8], index: 1, kind: input, shape index: {}]
  %s2 = inlined_call_operand.vmem [shape: f32[1,8], index: 2, kind: input, shape index: {}]
  %s3 = inlined_call_operand.vmem [shape: bf16[8,2], index: 3, kind: input, shape index: {}]
  %s4 = inlined_call_operand.vmem [shape: f32[1,2], index: 4, kind: input, shape index: {}]
  %s5 = inlined_call_operand.vmem [shape: bf16[16,8], index: 5, kind: output, shape index: {0}]
  %s6 = inlined_call_operand.vmem [shape: bf16[16,2], index: 6, kind: output, shape index: {1}]
  %7 = xla_tuple %s5, %s6
  %s8 = sld [smem:[#allocation0]]
  $region38: #{tpu_custom_call.1} parent=0
    _
  %s10 = ssub.s32 1, %s8
  %s11 = scalar_select 0, %s10, %s8
  // Predicated region
  $region2: #{tpu_custom_call.1} parent=0 // pred_check
    _
  $region3: #{tpu_custom_call.1} parent=0 // pred_check_branch
    %13 = sbr.rel (0) target = $region5
  $region4: #{tpu_custom_call.1} parent=0 // pred_region
    _
  $region5: #{tpu_custom_call.1} parent=0 // pred_fallthru
    _
  // Predicated region
  $region6: #{tpu_custom_call.1} parent=0 // pred_check
    _
  $region7: #{tpu_custom_call.1} parent=0 // pred_check_branch
    %15 = sbr.rel (0) target = $region9
  $region8: #{tpu_custom_call.1} parent=0 // pred_region
    _
  $region9: #{tpu_custom_call.1} parent=0 // pred_fallthru
    _
  // Predicated region
  $region10: #{tpu_custom_call.1} parent=0 // pred_check
    _
  $region11: #{tpu_custom_call.1} parent=0 // pred_check_branch
    %17 = sbr.rel (0) target = $region13
  $region12: #{tpu_custom_call.1} parent=0 // pred_region
    _
  $region13: #{tpu_custom_call.1} parent=0 // pred_fallthru
    _
  // Predicated region
  $region14: #{tpu_custom_call.1} parent=0 // pred_check
    _
  $region15: #{tpu_custom_call.1} parent=0 // pred_check_branch
    %19 = sbr.rel (0) target = $region17
  $region16: #{tpu_custom_call.1} parent=0 // pred_region
    _
  $region17: #{tpu_custom_call.1} parent=0 // pred_fallthru
    _
  // Predicated region
  $region18: #{tpu_custom_call.1} parent=0 // pred_check
    _
  $region19: #{tpu_custom_call.1} parent=0 // pred_check_branch
    %21 = sbr.rel (0) target = $region21
  $region20: #{tpu_custom_call.1} parent=0 // pred_region
    _
  $region21: #{tpu_custom_call.1} parent=0 // pred_fallthru
    _
  %v23 = vld [vmem:[%s0] sm:$0xff]
  %v24 = vld [vmem:[%s0 + $0x8] sm:$0xff]
  %v25 = vpack.c.bf16 %v24, %v23
  %v26 = vld [vmem:[%s1] sm:$0xf]
  %v27 = vld [vmem:[%s2] sm:$0x1]
  %v29 = vlaneseq
  %v30 = vshrl.u32 %v29, 7
  %v31 = vsub.s32 0, %v30
  %v32 = vrot.slane %v27, %v31
  %vm34 = vcmask 64512
  %v36 = vsel %vm34, %v25, 0
  %vm38 = vcmask 1043456
  %v40 = vsel %vm38, %v26, 0
  %42 = vmatprep.subr.bf16.mxu0 0
  %43 = vmatpush1.bf16.msra.mxu0 %v40
  %44 = vmatprep.subr.bf16.mxu0 0
  %45 = vmatpush1.bf16.msra.mxu0 0
  %46 = vmatprep.subr.bf16.mxu0 0
  %47 = vmatpush1.bf16.msra.mxu0 0
  %48 = vmatprep.subr.bf16.mxu0 0
  %49 = vmatpush1.bf16.msra.mxu0 0
  %50 = vmatprep.subr.bf16.mxu0 0
  %51 = vmatpush1.bf16.msra.mxu0 0
  %52 = vmatprep.subr.bf16.mxu0 0
  %53 = vmatpush1.bf16.msra.mxu0 0
  %54 = vmatprep.subr.bf16.mxu0 0
  %55 = vmatpush1.bf16.msra.mxu0 0
  %56 = vmatprep.subr.bf16.mxu0 0
  %57 = vmatpush1.bf16.msra.mxu0 0
  %58 = vmatprep.subr.bf16.mxu0 0
  %59 = vmatpush1.bf16.msra.mxu0 0
  %60 = vmatprep.subr.bf16.mxu0 0
  %61 = vmatpush1.bf16.msra.mxu0 0
  %62 = vmatprep.subr.bf16.mxu0 0
  %63 = vmatpush1.bf16.msra.mxu0 0
  %64 = vmatprep.subr.bf16.mxu0 0
  %65 = vmatpush1.bf16.msra.mxu0 0
  %66 = vmatprep.subr.bf16.mxu0 0
  %67 = vmatpush1.bf16.msra.mxu0 0
  %68 = vmatprep.subr.bf16.mxu0 0
  %69 = vmatpush1.bf16.msra.mxu0 0
  %70 = vmatprep.subr.bf16.mxu0 0
  %71 = vmatpush1.bf16.msra.mxu0 0
  %72 = vmatprep.subr.bf16.mxu0 0
  %73 = vmatpush1.bf16.msra.mxu0 0
  %74 = vmatprep.mubr.bf16.mxu0 0
  %75 = vmatmul.mubr.bf16.gmra.mrb[0].mxu0 %v36
  %v76 = vpop.f32.mrb[0].mxu0
  %v77 = vadd.f32 %v32, %v76
  %v78 = vpop.f32.mrb[0].mxu0
  %v79 = vpop.f32.mrb[0].mxu0
  %v80 = vadd.f32 %v32, %v79
  %v81 = vpop.f32.mrb[0].mxu0
  %82 = vdwg.mxu0
  %v83 = vld [vmem:[%s3] sm:$0xf]
  %v84 = vld [vmem:[%s4] sm:$0x1]
  %v86 = vlaneseq
  %v87 = vshrl.u32 %v86, 7
  %v88 = vsub.s32 0, %v87
  %v89 = vrot.slane %v84, %v88
  %v92 = vsel %vm38, %v83, 0
  %94 = vmatprep.subr.bf16.mxu0 0
  %95 = vmatpush1.bf16.msra.mxu0 %v92
  %96 = vmatprep.subr.bf16.mxu0 0
  %97 = vmatpush1.bf16.msra.mxu0 0
  %98 = vmatprep.subr.bf16.mxu0 0
  %99 = vmatpush1.bf16.msra.mxu0 0
  %100 = vmatprep.subr.bf16.mxu0 0
  %101 = vmatpush1.bf16.msra.mxu0 0
  %102 = vmatprep.subr.bf16.mxu0 0
  %103 = vmatpush1.bf16.msra.mxu0 0
  %104 = vmatprep.subr.bf16.mxu0 0
  %105 = vmatpush1.bf16.msra.mxu0 0
  %106 = vmatprep.subr.bf16.mxu0 0
  %107 = vmatpush1.bf16.msra.mxu0 0
  %108 = vmatprep.subr.bf16.mxu0 0
  %109 = vmatpush1.bf16.msra.mxu0 0
  %110 = vmatprep.subr.bf16.mxu0 0
  %111 = vmatpush1.bf16.msra.mxu0 0
  %112 = vmatprep.subr.bf16.mxu0 0
  %113 = vmatpush1.bf16.msra.mxu0 0
  %114 = vmatprep.subr.bf16.mxu0 0
  %115 = vmatpush1.bf16.msra.mxu0 0
  %116 = vmatprep.subr.bf16.mxu0 0
  %117 = vmatpush1.bf16.msra.mxu0 0
  %118 = vmatprep.subr.bf16.mxu0 0
  %119 = vmatpush1.bf16.msra.mxu0 0
  %120 = vmatprep.subr.bf16.mxu0 0
  %121 = vmatpush1.bf16.msra.mxu0 0
  %122 = vmatprep.subr.bf16.mxu0 0
  %123 = vmatpush1.bf16.msra.mxu0 0
  %124 = vmatprep.subr.bf16.mxu0 0
  %125 = vmatpush1.bf16.msra.mxu0 0
  %126 = vmatprep.mubr.bf16.mxu0 0
  %127 = vmatmul.mubr.bf16.gmra.mrb[0].mxu0 %v36
  %v128 = vpop.f32.mrb[0].mxu0
  %v129 = vadd.f32 %v89, %v128
  %v130 = vpop.f32.mrb[0].mxu0
  %v131 = vpop.f32.mrb[0].mxu0
  %v132 = vadd.f32 %v89, %v131
  %v133 = vpop.f32.mrb[0].mxu0
  %134 = vdwg.mxu0
  %v135 = vpack.c.bf16 %v80, %v77
  %v137 = vunpack.c.l.b16 %v135
  %v138 = vunpack.c.h.b16 %v135
  %v139 = vpack.c.b16 %v137, %v137
  %v140 = vpack.c.b16 %v138, %v138
  %vm143 = vcmask 60416
  %144 = vst.msk [vmem:[%s5] sm:$0xf] %vm143, %v139
  %145 = vst.msk [vmem:[%s5 + $0x4] sm:$0xf] %vm143, %v140
  %v146 = vpack.c.bf16 %v132, %v129
  %v148 = vunpack.c.l.b16 %v146
  %v149 = vunpack.c.h.b16 %v146
  %v150 = vpack.c.b16 %v148, %v148
  %v151 = vpack.c.b16 %v149, %v149
  %vm154 = vcmask 11264
  %155 = vst.msk [vmem:[%s6] sm:$0xf] %vm154, %v150
  %156 = vst.msk [vmem:[%s6 + $0x4] sm:$0xf] %vm154, %v151
  // Predicated region
  $region22: #{tpu_custom_call.1} parent=0 // pred_check
    _
  $region23: #{tpu_custom_call.1} parent=0 // pred_check_branch
    %158 = sbr.rel (0) target = $region25
  $region24: #{tpu_custom_call.1} parent=0 // pred_region
    _
  $region25: #{tpu_custom_call.1} parent=0 // pred_fallthru
    _
  // Predicated region
  $region26: #{tpu_custom_call.1} parent=0 // pred_check
    _
  $region27: #{tpu_custom_call.1} parent=0 // pred_check_branch
    %160 = sbr.rel (0) target = $region29
  $region28: #{tpu_custom_call.1} parent=0 // pred_region
    _
  $region29: #{tpu_custom_call.1} parent=0 // pred_fallthru
    _
  // Predicated region
  $region30: #{tpu_custom_call.1} parent=0 // pred_check
    _
  $region31: #{tpu_custom_call.1} parent=0 // pred_check_branch
    %162 = sbr.rel (0) target = $region33
  $region32: #{tpu_custom_call.1} parent=0 // pred_region
    _
  $region33: #{tpu_custom_call.1} parent=0 // pred_fallthru
    _
  // Predicated region
  $region34: #{tpu_custom_call.1} parent=0 // pred_check
    _
  $region35: #{tpu_custom_call.1} parent=0 // pred_check_branch
    %164 = sbr.rel (0) target = $region37
  $region36: #{tpu_custom_call.1} parent=0 // pred_region
    _
  $region37: #{tpu_custom_call.1} parent=0 // pred_fallthru
    _

</llo_original>
